<compile_context>
chip_gen: v5e
topology: v5e:2x2
jax: 0.10.0
libtpu: 0.0.40
codegen_flags: <defaults>
</compile_context>

<pallas_src>
import functools

import jax
import jax.numpy as jnp
from jax.experimental import pallas as pl
from jax.experimental.pallas import tpu as pltpu


def _round_up(x, m):
    return (x + m - 1) // m * m


def _perceptron_kernel(x_ref, w_ref, b_ref, t_ref, out_ref, cpart_ref, acc_ref,
                       *, mode, n_rows, n_cols, mask_rows, mask_cols):
    k = pl.program_id(1)

    @pl.when(k == 0)
    def _init():
        acc_ref[...] = jnp.zeros_like(acc_ref)

    # bf16 x bf16 -> f32 accumulate on the MXU; weight already laid out (K, Out).
    acc_ref[...] += jnp.dot(x_ref[...], w_ref[...],
                            preferred_element_type=jnp.float32)

    @pl.when(k == pl.num_programs(1) - 1)
    def _finalize():
        y = acc_ref[...] + b_ref[...]            # f32 (tB, OutP), bias broadcast
        t = t_ref[...]

        if mode == 1:
            p = jax.nn.sigmoid(y)
            out_ref[...] = p.astype(out_ref.dtype)
            # BCE from logits (numerically stable):
            #   log p      = min(y, 0)  - log(1 + e^-|y|)
            #   log (1-p)  = min(-y, 0) - log(1 + e^-|y|)
            # clamped at -100 to match torch.nn.BCELoss.
            log1pexp = jnp.log(1.0 + jnp.exp(-jnp.abs(y)))
            log_p = jnp.maximum(jnp.minimum(y, 0.0) - log1pexp, -100.0)
            log_1mp = jnp.maximum(jnp.minimum(-y, 0.0) - log1pexp, -100.0)
            per_elem = -(t * log_p + (1.0 - t) * log_1mp)
        elif mode == 2:
            out_ref[...] = y.astype(out_ref.dtype)
            diff = y - t
            per_elem = diff * diff
        else:
            raise ValueError("Error: Mode not supported.")

        tb, outp = per_elem.shape

        # Zero out contributions from padded rows / columns (static decision).
        if mask_rows or mask_cols:
            valid = None
            if mask_rows:
                rows = (jax.lax.broadcasted_iota(jnp.int32, (tb, outp), 0)
                        + pl.program_id(0) * tb)
                valid = rows < n_rows
            if mask_cols:
                cols = jax.lax.broadcasted_iota(jnp.int32, (tb, outp), 1)
                cvalid = cols < n_cols
                valid = cvalid if valid is None else (valid & cvalid)
            per_elem = jnp.where(valid, per_elem, 0.0)

        # Fold the (tB, OutP) per-element loss down to one lane-dense (8, 128)
        # block of partial sums using only static slices + VPU adds (no cross-lane
        # XLU reduce, no masked stores).  Final mean is finished in the wrapper.
        part = per_elem[:, 0:128]
        for c in range(128, outp, 128):
            part = part + per_elem[:, c:c + 128]
        acc8 = part[0:8, :]
        for r in range(8, tb, 8):
            acc8 = acc8 + part[r:r + 8, :]
        cpart_ref[0] = acc8


@functools.partial(jax.jit, static_argnames=("mode",))
def perceptron_forward(data, check_data, weight, bias, mode):
    """Fused linear + activation + loss. Returns (output, cost) like Perceptron.forward."""
    B, In = data.shape
    Out = weight.shape[0]

    # Lane/sublane- and MXU-friendly padding & tiling.
    out_p = _round_up(Out, 128)                    # lane-dense N dimension
    tile_b = min(256, _round_up(B, 8))             # batch tile (multiple of 8)
    b_p = _round_up(B, tile_b)
    tile_k = min(512, _round_up(In, 128))          # K tile (multiple of 128)
    k_p = _round_up(In, tile_k)
    grid_b = b_p // tile_b
    grid_k = k_p // tile_k

    # bf16 operands for the MXU; weight pre-transposed to (In, Out) so the kernel
    # never transposes.  Zero padding is neutral for the matmul.
    x_pad = jnp.pad(data, ((0, b_p - B), (0, k_p - In))).astype(jnp.bfloat16)
    w_t = jnp.pad(weight.T, ((0, k_p - In), (0, out_p - Out))).astype(jnp.bfloat16)
    bias2d = jnp.pad(bias, (0, out_p - Out)).astype(jnp.float32).reshape(1, out_p)
    t_pad = jnp.pad(check_data, ((0, b_p - B), (0, out_p - Out))).astype(jnp.float32)

    kernel = functools.partial(
        _perceptron_kernel, mode=mode, n_rows=B, n_cols=Out,
        mask_rows=(b_p != B), mask_cols=(out_p != Out))

    out_pad, cost_parts = pl.pallas_call(
        kernel,
        out_shape=(
            jax.ShapeDtypeStruct((b_p, out_p), data.dtype),
            jax.ShapeDtypeStruct((grid_b, 8, 128), jnp.float32),
        ),
        grid_spec=pltpu.PrefetchScalarGridSpec(
            num_scalar_prefetch=0,
            grid=(grid_b, grid_k),
            in_specs=[
                pl.BlockSpec((tile_b, tile_k), lambda b, k: (b, k)),   # x (bf16)
                pl.BlockSpec((tile_k, out_p), lambda b, k: (k, 0)),    # W^T (bf16)
                pl.BlockSpec((1, out_p), lambda b, k: (0, 0)),         # bias (f32)
                pl.BlockSpec((tile_b, out_p), lambda b, k: (b, 0)),    # targets (f32)
            ],
            out_specs=[
                pl.BlockSpec((tile_b, out_p), lambda b, k: (b, 0)),    # output
                pl.BlockSpec((1, 8, 128), lambda b, k: (b, 0, 0)),     # loss partials
            ],
            scratch_shapes=[pltpu.VMEM((tile_b, out_p), jnp.float32)], # f32 y acc
        ),
        compiler_params=pltpu.CompilerParams(
            dimension_semantics=("parallel", "arbitrary")),
    )(x_pad, w_t, bias2d, t_pad)

    output = out_pad[:B, :Out]
    # mean = sum * (1/(B*Out)); reciprocal folded at trace time (single multiply).
    cost = jnp.sum(cost_parts) * (1.0 / float(B * Out))
    return output, cost


# TODO(synk): back_prop() (SGD weight/bias update) is training logic outside the
# forward pass and is not implemented as a Pallas kernel here.

if __name__ == "__main__":
    key = jax.random.PRNGKey(0)
    k_x, k_t1, k_t2, k_w, k_b = jax.random.split(key, 5)

    batch = 8
    input_size = 32
    output_size = 16

    # Deterministic nn.Linear-style init: U(-1/sqrt(in), 1/sqrt(in))
    bound = 1.0 / float(input_size) ** 0.5
    weight = jax.random.uniform(
        k_w, (output_size, input_size), jnp.float32, -bound, bound)
    bias = jax.random.uniform(k_b, (output_size,), jnp.float32, -bound, bound)

    data = jax.random.normal(k_x, (batch, input_size), jnp.float32)
    targets_bce = jax.random.uniform(k_t1, (batch, output_size), jnp.float32)  # in [0,1]
    targets_mse = jax.random.normal(k_t2, (batch, output_size), jnp.float32)

    # mode 1: sigmoid + BCE ; mode 2: identity + MSE
    out1, cost1 = perceptron_forward(data, targets_bce, weight, bias, mode=1)
    out2, cost2 = perceptron_forward(data, targets_mse, weight, bias, mode=2)
    jax.block_until_ready((out1, cost1, out2, cost2))

    # Plain-JAX f32 reference (kernel feeds the MXU bf16 -> compare with loose tol).
    y_ref = data @ weight.T + bias
    p_ref = jax.nn.sigmoid(y_ref)
    bce_ref = jnp.mean(
        -(targets_bce * jnp.maximum(jnp.log(p_ref), -100.0)
          + (1.0 - targets_bce) * jnp.maximum(jnp.log(1.0 - p_ref), -100.0)))
    mse_ref = jnp.mean((y_ref - targets_mse) ** 2)

    assert out1.shape == (batch, output_size)
    assert out2.shape == (batch, output_size)
    assert jnp.allclose(out1, p_ref, atol=2e-2), "mode 1 output mismatch"
    assert jnp.allclose(cost1, bce_ref, atol=2e-2), "mode 1 cost mismatch"
    assert jnp.allclose(out2, y_ref, atol=2e-2), "mode 2 output mismatch"
    assert jnp.allclose(cost2, mse_ref, atol=2e-2), "mode 2 cost mismatch"

    print("KERNEL_OK")
</pallas_src>

<mosaic_0001>
module attributes {stable_mosaic.version = 11 : i64} {
  func.func @_perceptron_kernel(%arg0: i32, %arg1: i32, %arg2: memref<8x128xbf16, #tpu.memory_space<vmem>>, %arg3: memref<128x128xbf16, #tpu.memory_space<vmem>>, %arg4: memref<1x128xf32, #tpu.memory_space<vmem>>, %arg5: memref<8x128xf32, #tpu.memory_space<vmem>>, %arg6: memref<8x128xf32, #tpu.memory_space<vmem>>, %arg7: memref<1x8x128xf32, #tpu.memory_space<vmem>>, %arg8: memref<8x128xf32, #tpu.memory_space<vmem>>) attributes {dimension_semantics = [#tpu.dimension_semantics<parallel>, #tpu.dimension_semantics<arbitrary>], iteration_bounds = array<i64: 1, 1>, scalar_prefetch = 0 : i64, scratch_operands = 1 : i64, tpu.core_type = #tpu.core_type<tc>, window_params = [{transform_indices = @transform_0, window_bounds = array<i64: 8, 128>}, {transform_indices = @transform_1, window_bounds = array<i64: 128, 128>}, {pipeline_mode = #tpu.pipeline_mode<synchronous>, transform_indices = @transform_2, window_bounds = array<i64: 1, 128>}, {transform_indices = @transform_3, window_bounds = array<i64: 8, 128>}, {transform_indices = @transform_4, window_bounds = array<i64: 8, 128>}, {transform_indices = @transform_5, window_bounds = array<i64: 1, 8, 128>}]} {
    %c0_i32 = arith.constant 0 : i32
    %0 = arith.cmpi eq, %arg1, %c0_i32 : i32
    %1 = arith.extui %0 : i1 to i32
    %c0_i32_0 = arith.constant 0 : i32
    %2 = arith.cmpi ne, %1, %c0_i32_0 : i32
    scf.if %2 {
      %cst_10 = arith.constant 0.000000e+00 : f32
      %12 = vector.broadcast %cst_10 : f32 to vector<8x128xf32>
      %c0_11 = arith.constant 0 : index
      %c0_12 = arith.constant 0 : index
      %13 = vector.load %arg8[%c0_11, %c0_12] : memref<8x128xf32, #tpu.memory_space<vmem>>, vector<8x128xf32>
      tpu.vector_store %arg8[%c0_11, %c0_12], %12 {strides = array<i32>} : memref<8x128xf32, #tpu.memory_space<vmem>>, vector<8x128xf32>,
    } else {
    }
    %c0 = arith.constant 0 : index
    %c0_1 = arith.constant 0 : index
    %3 = vector.load %arg8[%c0, %c0_1] : memref<8x128xf32, #tpu.memory_space<vmem>>, vector<8x128xf32>
    %c0_2 = arith.constant 0 : index
    %c0_3 = arith.constant 0 : index
    %4 = vector.load %arg2[%c0_2, %c0_3] : memref<8x128xbf16, #tpu.memory_space<vmem>>, vector<8x128xbf16>
    %c0_4 = arith.constant 0 : index
    %c0_5 = arith.constant 0 : index
    %5 = vector.load %arg3[%c0_4, %c0_5] : memref<128x128xbf16, #tpu.memory_space<vmem>>, vector<128x128xbf16>
    %cst = arith.constant dense<0.000000e+00> : vector<8x128xf32>
    %6 = tpu.matmul %4, %5, %cst {dimension_numbers = #tpu.dot_dimension_numbers<[1], [0], [0], [1], [0, 0, 1, 1], [], []>} : vector<8x128xbf16>, vector<128x128xbf16>, vector<8x128xf32> -> vector<8x128xf32>
    %7 = arith.addf %3, %6 : vector<8x128xf32>
    %c0_6 = arith.constant 0 : index
    %c0_7 = arith.constant 0 : index
    %8 = vector.load %arg8[%c0_6, %c0_7] : memref<8x128xf32, #tpu.memory_space<vmem>>, vector<8x128xf32>
    tpu.vector_store %arg8[%c0_6, %c0_7], %7 {strides = array<i32>} : memref<8x128xf32, #tpu.memory_space<vmem>>, vector<8x128xf32>,
    %c0_i32_8 = arith.constant 0 : i32
    %9 = arith.cmpi eq, %arg1, %c0_i32_8 : i32
    %10 = arith.extui %9 : i1 to i32
    %c0_i32_9 = arith.constant 0 : i32
    %11 = arith.cmpi ne, %10, %c0_i32_9 : i32
    scf.if %11 {
      %c0_10 = arith.constant 0 : index
      %c0_11 = arith.constant 0 : index
      %12 = vector.load %arg8[%c0_10, %c0_11] : memref<8x128xf32, #tpu.memory_space<vmem>>, vector<8x128xf32>
      %c0_12 = arith.constant 0 : index
      %c0_13 = arith.constant 0 : index
      %13 = vector.load %arg4[%c0_12, %c0_13] : memref<1x128xf32, #tpu.memory_space<vmem>>, vector<1x128xf32>
      %14 = vector.broadcast %13 : vector<1x128xf32> to vector<8x128xf32>
      %15 = arith.addf %12, %14 : vector<8x128xf32>
      %c0_14 = arith.constant 0 : index
      %c0_15 = arith.constant 0 : index
      %16 = vector.load %arg5[%c0_14, %c0_15] : memref<8x128xf32, #tpu.memory_space<vmem>>, vector<8x128xf32>
      %17 = arith.negf %15 : vector<8x128xf32>
      %18 = math.exp %17 : vector<8x128xf32>
      %cst_16 = arith.constant 1.000000e+00 : f32
      %19 = vector.broadcast %cst_16 : f32 to vector<8x128xf32>
      %20 = arith.addf %19, %18 : vector<8x128xf32>
      %21 = arith.divf %19, %20 : vector<8x128xf32>
      %c0_17 = arith.constant 0 : index
      %c0_18 = arith.constant 0 : index
      %22 = vector.load %arg6[%c0_17, %c0_18] : memref<8x128xf32, #tpu.memory_space<vmem>>, vector<8x128xf32>
      tpu.vector_store %arg6[%c0_17, %c0_18], %21 {strides = array<i32>} : memref<8x128xf32, #tpu.memory_space<vmem>>, vector<8x128xf32>,
      %23 = math.absf %15 : vector<8x128xf32>
      %cst_19 = arith.constant 0.000000e+00 : f32
      %24 = vector.broadcast %cst_19 : f32 to vector<8x128xf32>
      %25 = arith.subf %24, %23 : vector<8x128xf32>
      %26 = math.exp %25 : vector<8x128xf32>
      %cst_20 = arith.constant 1.000000e+00 : f32
      %27 = vector.broadcast %cst_20 : f32 to vector<8x128xf32>
      %28 = arith.addf %27, %26 : vector<8x128xf32>
      %29 = math.log %28 : vector<8x128xf32>
      %cst_21 = arith.constant 0.000000e+00 : f32
      %30 = vector.broadcast %cst_21 : f32 to vector<8x128xf32>
      %31 = arith.minimumf %15, %30 : vector<8x128xf32>
      %32 = arith.subf %31, %29 : vector<8x128xf32>
      %cst_22 = arith.constant -1.000000e+02 : f32
      %33 = vector.broadcast %cst_22 : f32 to vector<8x128xf32>
      %34 = arith.maximumf %32, %33 : vector<8x128xf32>
      %cst_23 = arith.constant 0.000000e+00 : f32
      %35 = vector.broadcast %cst_23 : f32 to vector<8x128xf32>
      %36 = arith.subf %35, %15 : vector<8x128xf32>
      %cst_24 = arith.constant 0.000000e+00 : f32
      %37 = vector.broadcast %cst_24 : f32 to vector<8x128xf32>
      %38 = arith.minimumf %36, %37 : vector<8x128xf32>
      %39 = arith.subf %38, %29 : vector<8x128xf32>
      %cst_25 = arith.constant -1.000000e+02 : f32
      %40 = vector.broadcast %cst_25 : f32 to vector<8x128xf32>
      %41 = arith.maximumf %39, %40 : vector<8x128xf32>
      %42 = arith.mulf %16, %34 : vector<8x128xf32>
      %cst_26 = arith.constant 1.000000e+00 : f32
      %43 = vector.broadcast %cst_26 : f32 to vector<8x128xf32>
      %44 = arith.subf %43, %16 : vector<8x128xf32>
      %45 = arith.mulf %44, %41 : vector<8x128xf32>
      %46 = arith.addf %42, %45 : vector<8x128xf32>
      %cst_27 = arith.constant 0.000000e+00 : f32
      %47 = vector.broadcast %cst_27 : f32 to vector<8x128xf32>
      %48 = arith.subf %47, %46 : vector<8x128xf32>
      %49 = tpu.iota {dimensions = array<i32: 1>} : vector<8x128xi32>
      %c16_i32 = arith.constant 16 : i32
      %50 = vector.broadcast %c16_i32 : i32 to vector<8x128xi32>
      %51 = arith.cmpi slt, %49, %50 : vector<8x128xi32>
      %cst_28 = arith.constant 0.000000e+00 : f32
      %52 = vector.broadcast %cst_28 : f32 to vector<8x128xf32>
      %53 = arith.select %51, %48, %52 : vector<8x128xi1>, vector<8x128xf32>
      %c0_29 = arith.constant 0 : index
      %c0_30 = arith.constant 0 : index
      %c0_31 = arith.constant 0 : index
      %54 = vector.load %arg7[%c0_29, %c0_30, %c0_31] : memref<1x8x128xf32, #tpu.memory_space<vmem>>, vector<1x8x128xf32>
      %55 = vector.shape_cast %54 : vector<1x8x128xf32> to vector<8x128xf32>
      %56 = vector.shape_cast %53 : vector<8x128xf32> to vector<1x8x128xf32>
      tpu.vector_store %arg7[%c0_29, %c0_30, %c0_31], %56 {strides = array<i32>} : memref<1x8x128xf32, #tpu.memory_space<vmem>>, vector<1x8x128xf32>,
    } else {
    }
    return
  }
  func.func @transform_0(%arg0: i32, %arg1: i32) -> (i32, i32) {
    %c0_i32 = arith.constant 0 : i32
    return %arg0, %arg1 : i32, i32
  }
  func.func @transform_1(%arg0: i32, %arg1: i32) -> (i32, i32) {
    %c0_i32 = arith.constant 0 : i32
    %c0_i32_0 = arith.constant 0 : i32
    return %arg1, %c0_i32 : i32, i32
  }
  func.func @transform_2(%arg0: i32, %arg1: i32) -> (i32, i32) {
    %c0_i32 = arith.constant 0 : i32
    %c0_i32_0 = arith.constant 0 : i32
    %c0_i32_1 = arith.constant 0 : i32
    return %c0_i32, %c0_i32_0 : i32, i32
  }
  func.func @transform_3(%arg0: i32, %arg1: i32) -> (i32, i32) {
    %c0_i32 = arith.constant 0 : i32
    %c0_i32_0 = arith.constant 0 : i32
    return %arg0, %c0_i32 : i32, i32
  }
  func.func @transform_4(%arg0: i32, %arg1: i32) -> (i32, i32) {
    %c0_i32 = arith.constant 0 : i32
    %c0_i32_0 = arith.constant 0 : i32
    return %arg0, %c0_i32 : i32, i32
  }
  func.func @transform_5(%arg0: i32, %arg1: i32) -> (i32, i32, i32) {
    %c0_i32 = arith.constant 0 : i32
    %c0_i32_0 = arith.constant 0 : i32
    %c0_i32_1 = arith.constant 0 : i32
    return %arg0, %c0_i32, %c0_i32_0 : i32, i32, i32
  }
}

</mosaic_0001>

<llo_original>
// kernel: perceptron_forward.1
$region0: #{perceptron_forward.1}
  #allocation0 [shape = 'u32[]', space=smem, size = 0x4, offset = 0x4, fixed_abs, tag = 'smem constant byte address 0x4 - core index']
  #allocation1 [shape = 'u32[72,128]{1,0:T(1,128)}', space=vmem, size = 0x9000, scoped, tag = 'internal scratch']
  #allocation2 [shape = 'f32[8,128]{1,0:T(8,128)}', space=vmem, size = 0x1000, scoped, tag = 'scratch operand']
  %s0 = inlined_call_operand.vmem [shape: bf16[8,128], index: 0, kind: input, shape index: {}]
  %s1 = inlined_call_operand.vmem [shape: bf16[128,128], index: 1, kind: input, shape index: {}]
  %s2 = inlined_call_operand.vmem [shape: f32[1,128], index: 2, kind: input, shape index: {}]
  %s3 = inlined_call_operand.vmem [shape: f32[8,128], index: 3, kind: input, shape index: {}]
  %s4 = inlined_call_operand.hbm [shape: f32[8,128], index: 4, kind: output, shape index: {0}]
  %s5 = inlined_call_operand.vmem [shape: f32[1,8,128], index: 5, kind: output, shape index: {1}]
  %6 = xla_tuple %s4, %s5
  %s7 = sld [smem:[#allocation0]]
  $region42: #{perceptron_forward.1} parent=0
    _
  %s9 = ssub.s32 1, %s7
  %s10 = scalar_select 0, %s9, %s7
  $region1: #{perceptron_forward.1} parent=0
    #allocation3 [shape = 'u8[4096]{0}', space=vmem, size = 0x1000, scoped, tag = 'output window, operand 0, single buffered']
    #allocation4 [shape = 's32[1]{0}', space=sflag, size = 0x4, scoped, tag = 'scoped memory for perceptron_forward.1']
    %11 = vsyncpa [#allocation4], 0
    // Predicated region
    $region2: #{perceptron_forward.1} parent=1 // pred_check
      _
    $region3: #{perceptron_forward.1} parent=1 // pred_check_branch
      %13 = sbr.rel (0) target = $region5
    $region4: #{perceptron_forward.1} parent=1 // pred_region
      _
    $region5: #{perceptron_forward.1} parent=1 // pred_fallthru
      _
    // Predicated region
    $region6: #{perceptron_forward.1} parent=1 // pred_check
      _
    $region7: #{perceptron_forward.1} parent=1 // pred_check_branch
      %15 = sbr.rel (0) target = $region9
    $region8: #{perceptron_forward.1} parent=1 // pred_region
      _
    $region9: #{perceptron_forward.1} parent=1 // pred_fallthru
      _
    // Predicated region
    $region10: #{perceptron_forward.1} parent=1 // pred_check
      _
    $region11: #{perceptron_forward.1} parent=1 // pred_check_branch
      %17 = sbr.rel (0) target = $region13
    $region12: #{perceptron_forward.1} parent=1 // pred_region
      _
    $region13: #{perceptron_forward.1} parent=1 // pred_fallthru
      _
    // Predicated region
    $region14: #{perceptron_forward.1} parent=1 // pred_check
      _
    $region15: #{perceptron_forward.1} parent=1 // pred_check_branch
      %19 = sbr.rel (0) target = $region17
    $region16: #{perceptron_forward.1} parent=1 // pred_region
      _
    $region17: #{perceptron_forward.1} parent=1 // pred_fallthru
      _
    %p20 = scmp.eq.s32.totalorder 0, 0
    // Predicated region
    $region18: #{perceptron_forward.1} parent=1 // pred_check
      %p21 = pneg %p20
    $region19: #{perceptron_forward.1} parent=1 // pred_check_branch
      %23 = sbr.rel (%p21) target = $region21
    $region20: #{perceptron_forward.1} parent=1 // pred_region
      %24 = vst [vmem:[#allocation2] sm:$0xff] 0.0
    $region21: #{perceptron_forward.1} parent=1 // pred_fallthru
      _
    %v25 = vld [vmem:[#allocation2] sm:$0xff]
    %v26 = vld [vmem:[%s0] sm:$0xf]
    %v27 = vld [vmem:[%s1] sm:$0xf]
    %v28 = vld [vmem:[%s1 + $0x4] sm:$0xf]
    %v29 = vld [vmem:[%s1 + $0x8] sm:$0xf]
    %v30 = vld [vmem:[%s1 + $0xc] sm:$0xf]
    %v31 = vld [vmem:[%s1 + $0x10] sm:$0xf]
    %v32 = vld [vmem:[%s1 + $0x14] sm:$0xf]
    %v33 = vld [vmem:[%s1 + $0x18] sm:$0xf]
    %v34 = vld [vmem:[%s1 + $0x1c] sm:$0xf]
    %v35 = vld [vmem:[%s1 + $0x20] sm:$0xf]
    %v36 = vld [vmem:[%s1 + $0x24] sm:$0xf]
    %v37 = vld [vmem:[%s1 + $0x28] sm:$0xf]
    %v38 = vld [vmem:[%s1 + $0x2c] sm:$0xf]
    %v39 = vld [vmem:[%s1 + $0x30] sm:$0xf]
    %v40 = vld [vmem:[%s1 + $0x34] sm:$0xf]
    %v41 = vld [vmem:[%s1 + $0x38] sm:$0xf]
    %v42 = vld [vmem:[%s1 + $0x3c] sm:$0xf]
    %v59 = vunpack.c.l.b16 %v27
    %v60 = vunpack.c.l.b16 %v28
    %v61 = vunpack.c.l.b16 %v29
    %v62 = vunpack.c.l.b16 %v30
    %v63 = vunpack.c.l.b16 %v31
    %v64 = vunpack.c.l.b16 %v32
    %v65 = vunpack.c.l.b16 %v33
    %v66 = vunpack.c.l.b16 %v34
    %v67 = vunpack.c.l.b16 %v35
    %v68 = vunpack.c.l.b16 %v36
    %v69 = vunpack.c.l.b16 %v37
    %v70 = vunpack.c.l.b16 %v38
    %v71 = vunpack.c.l.b16 %v39
    %v72 = vunpack.c.l.b16 %v40
    %v73 = vunpack.c.l.b16 %v41
    %v74 = vunpack.c.l.b16 %v42
    %v75 = vpack.c.b16 %v60, %v59
    %v76 = vpack.c.b16 %v62, %v61
    %v77 = vpack.c.b16 %v64, %v63
    %v78 = vpack.c.b16 %v66, %v65
    %v79 = vpack.c.b16 %v68, %v67
    %v80 = vpack.c.b16 %v70, %v69
    %v81 = vpack.c.b16 %v72, %v71
    %v82 = vpack.c.b16 %v74, %v73
    %91 = vmatpush.bf16.msra.mxu0 %v82
    %92 = vmatpush.bf16.msra.mxu0 %v81
    %93 = vmatpush.bf16.msra.mxu0 %v80
    %94 = vmatpush.bf16.msra.mxu0 %v79
    %95 = vmatpush.bf16.msra.mxu0 %v78
    %96 = vmatpush.bf16.msra.mxu0 %v77
    %97 = vmatpush.bf16.msra.mxu0 %v76
    %98 = vmatpush.bf16.msra.mxu0 %v75
    %99 = vmatmul.bf16.gmra.mxu0 %v26
    %v100 = vpop.f32.mrf.mxu0
    %v101 = vadd.f32 0.0, %v100
    %v102 = vpop.f32.mrf.mxu0
    %103 = vdwg.mxu0
    %v104 = vadd.f32 %v25, %v101
    %105 = vst [vmem:[#allocation2] sm:$0xff] %v104
    // Predicated region
    $region22: #{perceptron_forward.1} parent=1 // pred_check
      %p106 = pneg %p20
    $region23: #{perceptron_forward.1} parent=1 // pred_check_branch
      %108 = sbr.rel (%p106) target = $region25
    $region24: #{perceptron_forward.1} parent=1 // pred_region
      %v109 = vld [vmem:[#allocation2] sm:$0xff]
      %v110 = vld [vmem:[%s2] sm:$0x1]
      %v112 = vperm.slane %v110, 0
      %v114 = vadd.f32 %v109, %v112
      %v115 = vld [vmem:[%s3] sm:$0xff]
      %v116 = vxor.u32 %v114, 2147483648
      %v117 = vmul.f32 %v116, 1.442695
      %v118 = vpow.pop %v117
      %v119 = vadd.f32 %v118, 1.0
      %v120 = vrcp.pop %v119
      %v121 = vmul.f32 %v119, %v120
      %v122 = vsub.f32 1.0, %v121
      %v123 = vmul.f32 %v120, %v122
      %v124 = vadd.f32 %v120, %v123
      %vm125 = vweird.f32 %v119
      %vm126 = vweird.f32 %v120
      %vm127 = vmor %vm125, %vm126
      %v128 = vsel %vm127, %v120, %v124
      %v129 = vand.u32 2147483647, %v119
      %vm130 = vcmp.eq.f32.partialorder %v129, 8.507059e+37
      %v131 = vand.u32 %v119, 2147483648
      %v132 = vor.u32 1.1754944e-38, %v131
      %v133 = vsel %vm130, %v132, %v128
      %v134 = vmul.f32 1.0, %v133
      %135 = vst [vmem:[#allocation3] sm:$0xff] %v134
      %v136 = vand.u32 2147483647, %v114
      %v137 = vsub.f32 0.0, %v136
      %v138 = vmul.f32 %v137, 1.442695
      %v139 = vpow.pop %v138
      %v140 = vadd.f32 %v139, 1.0
      %v141 = vlog2.pop %v140
      %v142 = vmul.f32 %v141, 0.6931472
      %v143 = vmin.f32 %v114, 0.0
      %v144 = vsub.f32 %v143, %v142
      %v145 = vmax.f32 %v144, -100.0
      %v146 = vsub.f32 0.0, %v114
      %v147 = vmin.f32 %v146, 0.0
      %v148 = vsub.f32 %v147, %v142
      %v149 = vmax.f32 %v148, -100.0
      %v150 = vmul.f32 %v115, %v145
      %v151 = vsub.f32 1.0, %v115
      %v152 = vmul.f32 %v151, %v149
      %v153 = vadd.f32 %v150, %v152
      %v154 = vsub.f32 0.0, %v153
      %v155 = vlaneseq
      %v156 = vand.u32 %v155, 127
      %vm157 = vcmp.lt.s32.totalorder %v156, 16
      %v158 = vsel %vm157, %v154, 0.0
      %159 = vst [vmem:[%s5] sm:$0xff] %v158
    $region25: #{perceptron_forward.1} parent=1 // pred_fallthru
      _
    // Predicated region
    $region26: #{perceptron_forward.1} parent=1 // pred_check
      _
    $region27: #{perceptron_forward.1} parent=1 // pred_check_branch
      %161 = sbr.rel (0) target = $region29
    $region28: #{perceptron_forward.1} parent=1 // pred_region
      %163 = vsyncadd [#allocation4], 0
      %s165 = sshll.u32 [#allocation3], 4
      %s166 = int_to_ptr.vmem [resolvable:$true] %s165
      %s167 = sshll.u32 %s4, 4
      %s168 = int_to_ptr.hbm [resolvable:$true] %s167
      %170 = dma.vmem_to_hbm [thread:$0]  %s166, 128, %s168, [#allocation4]
    $region29: #{perceptron_forward.1} parent=1 // pred_fallthru
      _
    // Predicated region
    $region30: #{perceptron_forward.1} parent=1 // pred_check
      _
    $region31: #{perceptron_forward.1} parent=1 // pred_check_branch
      %172 = sbr.rel (0) target = $region33
    $region32: #{perceptron_forward.1} parent=1 // pred_region
      _
    $region33: #{perceptron_forward.1} parent=1 // pred_fallthru
      _
    // Predicated region
    $region34: #{perceptron_forward.1} parent=1 // pred_check
      _
    $region35: #{perceptron_forward.1} parent=1 // pred_check_branch
      %174 = sbr.rel (0) target = $region37
    $region36: #{perceptron_forward.1} parent=1 // pred_region
      %176 = dma.done [#allocation4], 128
    $region37: #{perceptron_forward.1} parent=1 // pred_fallthru
      _
    // Predicated region
    $region38: #{perceptron_forward.1} parent=1 // pred_check
      _
    $region39: #{perceptron_forward.1} parent=1 // pred_check_branch
      %178 = sbr.rel (0) target = $region41
    $region40: #{perceptron_forward.1} parent=1 // pred_region
      _
    $region41: #{perceptron_forward.1} parent=1 // pred_fallthru
      _
    %179 = vsyncpa [#allocation4], 1

</llo_original>
